<compile_context>
chip_gen: v5e
topology: v5e:2x2
jax: 0.10.0
libtpu: 0.0.40
codegen_flags: <defaults>
</compile_context>

<pallas_src>
import functools

import jax
import jax.numpy as jnp
from jax.experimental import pallas as pl
from jax.experimental.pallas import tpu as pltpu


def _round_up(x, m):
    return ((x + m - 1) // m) * m


def _gather_kernel(idx_ref, table_ref, out_ref, sems, *, nbuf, n_valid):
    """Row gather: out_ref[t, :] = table[idx[i*tn + t], :] via a DMA ring.

    idx_ref:   (n_pad,) int32 in SMEM (scalar prefetch)
    table_ref: (V, D) ref left in HBM (memory_space=pl.ANY)
    out_ref:   (tn, D) pipelined VMEM output block
    sems:      (nbuf,) DMA semaphores (ring of in-flight row copies)
    """
    i = pl.program_id(0)
    tn = out_ref.shape[0]
    base = i * tn

    def start(t):
        row = idx_ref[base + t]
        pltpu.make_async_copy(
            table_ref.at[row], out_ref.at[t], sems.at[t % nbuf]
        ).start()

    def wait(t):
        # Wait descriptor only needs matching shapes + the same semaphore slot.
        pltpu.make_async_copy(
            table_ref.at[0], out_ref.at[t], sems.at[t % nbuf]
        ).wait()

    # Prime the ring with the first `nbuf` row copies of this tile.
    for t in range(min(nbuf, tn)):
        @pl.when(base + t < n_valid)
        def _(t=t):
            start(t)

    # Steady state: retire row t, then reuse its slot for row t + nbuf.
    @pl.loop(0, tn)
    def _(t):
        @pl.when(base + t < n_valid)
        def _():
            wait(t)

        @pl.when(jnp.logical_and(t + nbuf < tn, base + t + nbuf < n_valid))
        def _():
            start(t + nbuf)


def item_embedding_forward(x, table, *, tile_tokens=256, n_inflight=8):
    """Pallas equivalent of ItemEmbedding.forward: table[x].

    x:     integer token ids, arbitrary shape.
    table: (num_embeddings, embedding_dim) embedding table.
    returns: x.shape + (embedding_dim,) in table.dtype.
    """
    v, d = table.shape
    orig_shape = x.shape

    # Flatten; clamp ids defensively (nn.Embedding would fault on OOB ids).
    idx = jnp.clip(x.reshape(-1).astype(jnp.int32), 0, v - 1)
    n = idx.shape[0]

    # Token tile: large (amortizes per-grid-step overhead), sublane-multiple.
    tn = min(tile_tokens, _round_up(n, 8))
    n_pad = _round_up(n, tn)
    if n_pad != n:
        idx = jnp.pad(idx, (0, n_pad - n))

    nbuf = max(1, min(n_inflight, tn))
    grid = (n_pad // tn,)

    kernel = functools.partial(_gather_kernel, nbuf=nbuf, n_valid=n)

    out = pl.pallas_call(
        kernel,
        out_shape=jax.ShapeDtypeStruct((n_pad, d), table.dtype),
        grid_spec=pltpu.PrefetchScalarGridSpec(
            num_scalar_prefetch=1,              # idx lands in SMEM
            grid=grid,
            in_specs=[
                pl.BlockSpec(memory_space=pl.ANY),   # table stays in HBM
            ],
            out_specs=pl.BlockSpec((tn, d), lambda i, idx_ref: (i, 0)),
            scratch_shapes=[pltpu.SemaphoreType.DMA((nbuf,))],
        ),
        compiler_params=pltpu.CompilerParams(
            dimension_semantics=("parallel",),
        ),
    )(idx, table)

    return out[:n].reshape(*orig_shape, d)


if __name__ == "__main__":
    # Synthetic "itemdex" table: num_embeddings=64 items, embedding_dim=32.
    num_embeddings = 64
    embedding_dim = 32

    key = jax.random.PRNGKey(0)
    k_table, k_idx, k_idx2 = jax.random.split(key, 3)

    table = jax.random.normal(
        k_table, (num_embeddings, embedding_dim), dtype=jnp.float32
    )

    # Small case: batch=2, seq=8 (single tile, single grid step).
    x = jax.random.randint(k_idx, (2, 8), 0, num_embeddings, dtype=jnp.int32)
    out = jax.block_until_ready(item_embedding_forward(x, table))
    ref = jnp.take(table, x, axis=0)
    assert out.shape == (2, 8, embedding_dim), out.shape
    assert jnp.allclose(out, ref, atol=1e-6), "mismatch vs reference (small)"

    # Larger case: exercises multiple grid tiles + ragged-tail masking.
    x2 = jax.random.randint(k_idx2, (3, 100), 0, num_embeddings, dtype=jnp.int32)
    out2 = jax.block_until_ready(item_embedding_forward(x2, table))
    ref2 = jnp.take(table, x2, axis=0)
    assert out2.shape == (3, 100, embedding_dim), out2.shape
    assert jnp.allclose(out2, ref2, atol=1e-6), "mismatch vs reference (tiled)"

    print("KERNEL_OK")
</pallas_src>

<mosaic_0001>
module attributes {stable_mosaic.version = 11 : i64} {
  func.func @_gather_kernel(%arg0: i32, %arg1: memref<16xi32, #tpu.memory_space<smem>>, %arg2: memref<64x32xf32, #tpu.memory_space<any>>, %arg3: memref<16x32xf32, #tpu.memory_space<vmem>>, %arg4: memref<8x!tpu.dma_semaphore, #tpu.memory_space<semaphore_mem>>) attributes {dimension_semantics = [#tpu.dimension_semantics<parallel>], iteration_bounds = array<i64: 1>, scalar_prefetch = 1 : i64, scratch_operands = 1 : i64, tpu.core_type = #tpu.core_type<tc>, window_params = [{}, {transform_indices = @transform_1, window_bounds = array<i64: 16, 32>}]} {
    %c16_i32 = arith.constant 16 : i32
    %0 = arith.muli %arg0, %c16_i32 : i32
    %c0_i32 = arith.constant 0 : i32
    %1 = arith.addi %0, %c0_i32 : i32
    %c16_i32_0 = arith.constant 16 : i32
    %2 = arith.cmpi slt, %1, %c16_i32_0 : i32
    %3 = arith.extui %2 : i1 to i32
    %c0_i32_1 = arith.constant 0 : i32
    %4 = arith.cmpi ne, %3, %c0_i32_1 : i32
    scf.if %4 {
      %c0_i32_20 = arith.constant 0 : i32
      %34 = arith.addi %0, %c0_i32_20 : i32
      %35 = arith.index_cast %34 : i32 to index
      %36 = memref.load %arg1[%35] : memref<16xi32, #tpu.memory_space<smem>>
      %c0_i32_21 = arith.constant 0 : i32
      %c0_i32_22 = arith.constant 0 : i32
      %c0_i32_23 = arith.constant 0 : i32
      %37 = tpu.memref_slice %arg2[%36, %c0_i32_23] : memref<64x32xf32, #tpu.memory_space<any>> -> memref<1x32xf32, #tpu.memory_space<any>>
      %38 = tpu.memref_squeeze %37 : memref<1x32xf32, #tpu.memory_space<any>> -> memref<32xf32, #tpu.memory_space<any>>
      %c0_i32_24 = arith.constant 0 : i32
      %39 = tpu.memref_slice %arg3[%c0_i32_21, %c0_i32_24] : memref<16x32xf32, #tpu.memory_space<vmem>> -> memref<1x32xf32, #tpu.memory_space<vmem>>
      %40 = tpu.memref_squeeze %39 : memref<1x32xf32, #tpu.memory_space<vmem>> -> memref<32xf32, #tpu.memory_space<vmem>>
      %41 = tpu.memref_slice %arg4[%c0_i32_22] : memref<8x!tpu.dma_semaphore, #tpu.memory_space<semaphore_mem>> -> memref<1x!tpu.dma_semaphore, #tpu.memory_space<semaphore_mem>>
      %42 = tpu.memref_squeeze %41 : memref<1x!tpu.dma_semaphore, #tpu.memory_space<semaphore_mem>> -> memref<!tpu.dma_semaphore, #tpu.memory_space<semaphore_mem>>
      tpu.enqueue_dma source(%38 : memref<32xf32, #tpu.memory_space<any>>) target(%40 : memref<32xf32, #tpu.memory_space<vmem>>) target_semaphore(%42 : memref<!tpu.dma_semaphore, #tpu.memory_space<semaphore_mem>>)
    } else {
    }
    %c1_i32 = arith.constant 1 : i32
    %5 = arith.addi %0, %c1_i32 : i32
    %c16_i32_2 = arith.constant 16 : i32
    %6 = arith.cmpi slt, %5, %c16_i32_2 : i32
    %7 = arith.extui %6 : i1 to i32
    %c0_i32_3 = arith.constant 0 : i32
    %8 = arith.cmpi ne, %7, %c0_i32_3 : i32
    scf.if %8 {
      %c1_i32_20 = arith.constant 1 : i32
      %34 = arith.addi %0, %c1_i32_20 : i32
      %35 = arith.index_cast %34 : i32 to index
      %36 = memref.load %arg1[%35] : memref<16xi32, #tpu.memory_space<smem>>
      %c1_i32_21 = arith.constant 1 : i32
      %c1_i32_22 = arith.constant 1 : i32
      %c0_i32_23 = arith.constant 0 : i32
      %37 = tpu.memref_slice %arg2[%36, %c0_i32_23] : memref<64x32xf32, #tpu.memory_space<any>> -> memref<1x32xf32, #tpu.memory_space<any>>
      %38 = tpu.memref_squeeze %37 : memref<1x32xf32, #tpu.memory_space<any>> -> memref<32xf32, #tpu.memory_space<any>>
      %c0_i32_24 = arith.constant 0 : i32
      %39 = tpu.memref_slice %arg3[%c1_i32_21, %c0_i32_24] : memref<16x32xf32, #tpu.memory_space<vmem>> -> memref<1x32xf32, #tpu.memory_space<vmem>>
      %40 = tpu.memref_squeeze %39 : memref<1x32xf32, #tpu.memory_space<vmem>> -> memref<32xf32, #tpu.memory_space<vmem>>
      %41 = tpu.memref_slice %arg4[%c1_i32_22] : memref<8x!tpu.dma_semaphore, #tpu.memory_space<semaphore_mem>> -> memref<1x!tpu.dma_semaphore, #tpu.memory_space<semaphore_mem>>
      %42 = tpu.memref_squeeze %41 : memref<1x!tpu.dma_semaphore, #tpu.memory_space<semaphore_mem>> -> memref<!tpu.dma_semaphore, #tpu.memory_space<semaphore_mem>>
      tpu.enqueue_dma source(%38 : memref<32xf32, #tpu.memory_space<any>>) target(%40 : memref<32xf32, #tpu.memory_space<vmem>>) target_semaphore(%42 : memref<!tpu.dma_semaphore, #tpu.memory_space<semaphore_mem>>)
    } else {
    }
    %c2_i32 = arith.constant 2 : i32
    %9 = arith.addi %0, %c2_i32 : i32
    %c16_i32_4 = arith.constant 16 : i32
    %10 = arith.cmpi slt, %9, %c16_i32_4 : i32
    %11 = arith.extui %10 : i1 to i32
    %c0_i32_5 = arith.constant 0 : i32
    %12 = arith.cmpi ne, %11, %c0_i32_5 : i32
    scf.if %12 {
      %c2_i32_20 = arith.constant 2 : i32
      %34 = arith.addi %0, %c2_i32_20 : i32
      %35 = arith.index_cast %34 : i32 to index
      %36 = memref.load %arg1[%35] : memref<16xi32, #tpu.memory_space<smem>>
      %c2_i32_21 = arith.constant 2 : i32
      %c2_i32_22 = arith.constant 2 : i32
      %c0_i32_23 = arith.constant 0 : i32
      %37 = tpu.memref_slice %arg2[%36, %c0_i32_23] : memref<64x32xf32, #tpu.memory_space<any>> -> memref<1x32xf32, #tpu.memory_space<any>>
      %38 = tpu.memref_squeeze %37 : memref<1x32xf32, #tpu.memory_space<any>> -> memref<32xf32, #tpu.memory_space<any>>
      %c0_i32_24 = arith.constant 0 : i32
      %39 = tpu.memref_slice %arg3[%c2_i32_21, %c0_i32_24] : memref<16x32xf32, #tpu.memory_space<vmem>> -> memref<1x32xf32, #tpu.memory_space<vmem>>
      %40 = tpu.memref_squeeze %39 : memref<1x32xf32, #tpu.memory_space<vmem>> -> memref<32xf32, #tpu.memory_space<vmem>>
      %41 = tpu.memref_slice %arg4[%c2_i32_22] : memref<8x!tpu.dma_semaphore, #tpu.memory_space<semaphore_mem>> -> memref<1x!tpu.dma_semaphore, #tpu.memory_space<semaphore_mem>>
      %42 = tpu.memref_squeeze %41 : memref<1x!tpu.dma_semaphore, #tpu.memory_space<semaphore_mem>> -> memref<!tpu.dma_semaphore, #tpu.memory_space<semaphore_mem>>
      tpu.enqueue_dma source(%38 : memref<32xf32, #tpu.memory_space<any>>) target(%40 : memref<32xf32, #tpu.memory_space<vmem>>) target_semaphore(%42 : memref<!tpu.dma_semaphore, #tpu.memory_space<semaphore_mem>>)
    } else {
    }
    %c3_i32 = arith.constant 3 : i32
    %13 = arith.addi %0, %c3_i32 : i32
    %c16_i32_6 = arith.constant 16 : i32
    %14 = arith.cmpi slt, %13, %c16_i32_6 : i32
    %15 = arith.extui %14 : i1 to i32
    %c0_i32_7 = arith.constant 0 : i32
    %16 = arith.cmpi ne, %15, %c0_i32_7 : i32
    scf.if %16 {
      %c3_i32_20 = arith.constant 3 : i32
      %34 = arith.addi %0, %c3_i32_20 : i32
      %35 = arith.index_cast %34 : i32 to index
      %36 = memref.load %arg1[%35] : memref<16xi32, #tpu.memory_space<smem>>
      %c3_i32_21 = arith.constant 3 : i32
      %c3_i32_22 = arith.constant 3 : i32
      %c0_i32_23 = arith.constant 0 : i32
      %37 = tpu.memref_slice %arg2[%36, %c0_i32_23] : memref<64x32xf32, #tpu.memory_space<any>> -> memref<1x32xf32, #tpu.memory_space<any>>
      %38 = tpu.memref_squeeze %37 : memref<1x32xf32, #tpu.memory_space<any>> -> memref<32xf32, #tpu.memory_space<any>>
      %c0_i32_24 = arith.constant 0 : i32
      %39 = tpu.memref_slice %arg3[%c3_i32_21, %c0_i32_24] : memref<16x32xf32, #tpu.memory_space<vmem>> -> memref<1x32xf32, #tpu.memory_space<vmem>>
      %40 = tpu.memref_squeeze %39 : memref<1x32xf32, #tpu.memory_space<vmem>> -> memref<32xf32, #tpu.memory_space<vmem>>
      %41 = tpu.memref_slice %arg4[%c3_i32_22] : memref<8x!tpu.dma_semaphore, #tpu.memory_space<semaphore_mem>> -> memref<1x!tpu.dma_semaphore, #tpu.memory_space<semaphore_mem>>
      %42 = tpu.memref_squeeze %41 : memref<1x!tpu.dma_semaphore, #tpu.memory_space<semaphore_mem>> -> memref<!tpu.dma_semaphore, #tpu.memory_space<semaphore_mem>>
      tpu.enqueue_dma source(%38 : memref<32xf32, #tpu.memory_space<any>>) target(%40 : memref<32xf32, #tpu.memory_space<vmem>>) target_semaphore(%42 : memref<!tpu.dma_semaphore, #tpu.memory_space<semaphore_mem>>)
    } else {
    }
    %c4_i32 = arith.constant 4 : i32
    %17 = arith.addi %0, %c4_i32 : i32
    %c16_i32_8 = arith.constant 16 : i32
    %18 = arith.cmpi slt, %17, %c16_i32_8 : i32
    %19 = arith.extui %18 : i1 to i32
    %c0_i32_9 = arith.constant 0 : i32
    %20 = arith.cmpi ne, %19, %c0_i32_9 : i32
    scf.if %20 {
      %c4_i32_20 = arith.constant 4 : i32
      %34 = arith.addi %0, %c4_i32_20 : i32
      %35 = arith.index_cast %34 : i32 to index
      %36 = memref.load %arg1[%35] : memref<16xi32, #tpu.memory_space<smem>>
      %c4_i32_21 = arith.constant 4 : i32
      %c4_i32_22 = arith.constant 4 : i32
      %c0_i32_23 = arith.constant 0 : i32
      %37 = tpu.memref_slice %arg2[%36, %c0_i32_23] : memref<64x32xf32, #tpu.memory_space<any>> -> memref<1x32xf32, #tpu.memory_space<any>>
      %38 = tpu.memref_squeeze %37 : memref<1x32xf32, #tpu.memory_space<any>> -> memref<32xf32, #tpu.memory_space<any>>
      %c0_i32_24 = arith.constant 0 : i32
      %39 = tpu.memref_slice %arg3[%c4_i32_21, %c0_i32_24] : memref<16x32xf32, #tpu.memory_space<vmem>> -> memref<1x32xf32, #tpu.memory_space<vmem>>
      %40 = tpu.memref_squeeze %39 : memref<1x32xf32, #tpu.memory_space<vmem>> -> memref<32xf32, #tpu.memory_space<vmem>>
      %41 = tpu.memref_slice %arg4[%c4_i32_22] : memref<8x!tpu.dma_semaphore, #tpu.memory_space<semaphore_mem>> -> memref<1x!tpu.dma_semaphore, #tpu.memory_space<semaphore_mem>>
      %42 = tpu.memref_squeeze %41 : memref<1x!tpu.dma_semaphore, #tpu.memory_space<semaphore_mem>> -> memref<!tpu.dma_semaphore, #tpu.memory_space<semaphore_mem>>
      tpu.enqueue_dma source(%38 : memref<32xf32, #tpu.memory_space<any>>) target(%40 : memref<32xf32, #tpu.memory_space<vmem>>) target_semaphore(%42 : memref<!tpu.dma_semaphore, #tpu.memory_space<semaphore_mem>>)
    } else {
    }
    %c5_i32 = arith.constant 5 : i32
    %21 = arith.addi %0, %c5_i32 : i32
    %c16_i32_10 = arith.constant 16 : i32
    %22 = arith.cmpi slt, %21, %c16_i32_10 : i32
    %23 = arith.extui %22 : i1 to i32
    %c0_i32_11 = arith.constant 0 : i32
    %24 = arith.cmpi ne, %23, %c0_i32_11 : i32
    scf.if %24 {
      %c5_i32_20 = arith.constant 5 : i32
      %34 = arith.addi %0, %c5_i32_20 : i32
      %35 = arith.index_cast %34 : i32 to index
      %36 = memref.load %arg1[%35] : memref<16xi32, #tpu.memory_space<smem>>
      %c5_i32_21 = arith.constant 5 : i32
      %c5_i32_22 = arith.constant 5 : i32
      %c0_i32_23 = arith.constant 0 : i32
      %37 = tpu.memref_slice %arg2[%36, %c0_i32_23] : memref<64x32xf32, #tpu.memory_space<any>> -> memref<1x32xf32, #tpu.memory_space<any>>
      %38 = tpu.memref_squeeze %37 : memref<1x32xf32, #tpu.memory_space<any>> -> memref<32xf32, #tpu.memory_space<any>>
      %c0_i32_24 = arith.constant 0 : i32
      %39 = tpu.memref_slice %arg3[%c5_i32_21, %c0_i32_24] : memref<16x32xf32, #tpu.memory_space<vmem>> -> memref<1x32xf32, #tpu.memory_space<vmem>>
      %40 = tpu.memref_squeeze %39 : memref<1x32xf32, #tpu.memory_space<vmem>> -> memref<32xf32, #tpu.memory_space<vmem>>
      %41 = tpu.memref_slice %arg4[%c5_i32_22] : memref<8x!tpu.dma_semaphore, #tpu.memory_space<semaphore_mem>> -> memref<1x!tpu.dma_semaphore, #tpu.memory_space<semaphore_mem>>
      %42 = tpu.memref_squeeze %41 : memref<1x!tpu.dma_semaphore, #tpu.memory_space<semaphore_mem>> -> memref<!tpu.dma_semaphore, #tpu.memory_space<semaphore_mem>>
      tpu.enqueue_dma source(%38 : memref<32xf32, #tpu.memory_space<any>>) target(%40 : memref<32xf32, #tpu.memory_space<vmem>>) target_semaphore(%42 : memref<!tpu.dma_semaphore, #tpu.memory_space<semaphore_mem>>)
    } else {
    }
    %c6_i32 = arith.constant 6 : i32
    %25 = arith.addi %0, %c6_i32 : i32
    %c16_i32_12 = arith.constant 16 : i32
    %26 = arith.cmpi slt, %25, %c16_i32_12 : i32
    %27 = arith.extui %26 : i1 to i32
    %c0_i32_13 = arith.constant 0 : i32
    %28 = arith.cmpi ne, %27, %c0_i32_13 : i32
    scf.if %28 {
      %c6_i32_20 = arith.constant 6 : i32
      %34 = arith.addi %0, %c6_i32_20 : i32
      %35 = arith.index_cast %34 : i32 to index
      %36 = memref.load %arg1[%35] : memref<16xi32, #tpu.memory_space<smem>>
      %c6_i32_21 = arith.constant 6 : i32
      %c6_i32_22 = arith.constant 6 : i32
      %c0_i32_23 = arith.constant 0 : i32
      %37 = tpu.memref_slice %arg2[%36, %c0_i32_23] : memref<64x32xf32, #tpu.memory_space<any>> -> memref<1x32xf32, #tpu.memory_space<any>>
      %38 = tpu.memref_squeeze %37 : memref<1x32xf32, #tpu.memory_space<any>> -> memref<32xf32, #tpu.memory_space<any>>
      %c0_i32_24 = arith.constant 0 : i32
      %39 = tpu.memref_slice %arg3[%c6_i32_21, %c0_i32_24] : memref<16x32xf32, #tpu.memory_space<vmem>> -> memref<1x32xf32, #tpu.memory_space<vmem>>
      %40 = tpu.memref_squeeze %39 : memref<1x32xf32, #tpu.memory_space<vmem>> -> memref<32xf32, #tpu.memory_space<vmem>>
      %41 = tpu.memref_slice %arg4[%c6_i32_22] : memref<8x!tpu.dma_semaphore, #tpu.memory_space<semaphore_mem>> -> memref<1x!tpu.dma_semaphore, #tpu.memory_space<semaphore_mem>>
      %42 = tpu.memref_squeeze %41 : memref<1x!tpu.dma_semaphore, #tpu.memory_space<semaphore_mem>> -> memref<!tpu.dma_semaphore, #tpu.memory_space<semaphore_mem>>
      tpu.enqueue_dma source(%38 : memref<32xf32, #tpu.memory_space<any>>) target(%40 : memref<32xf32, #tpu.memory_space<vmem>>) target_semaphore(%42 : memref<!tpu.dma_semaphore, #tpu.memory_space<semaphore_mem>>)
    } else {
    }
    %c7_i32 = arith.constant 7 : i32
    %29 = arith.addi %0, %c7_i32 : i32
    %c16_i32_14 = arith.constant 16 : i32
    %30 = arith.cmpi slt, %29, %c16_i32_14 : i32
    %31 = arith.extui %30 : i1 to i32
    %c0_i32_15 = arith.constant 0 : i32
    %32 = arith.cmpi ne, %31, %c0_i32_15 : i32
    scf.if %32 {
      %c7_i32_20 = arith.constant 7 : i32
      %34 = arith.addi %0, %c7_i32_20 : i32
      %35 = arith.index_cast %34 : i32 to index
      %36 = memref.load %arg1[%35] : memref<16xi32, #tpu.memory_space<smem>>
      %c7_i32_21 = arith.constant 7 : i32
      %c7_i32_22 = arith.constant 7 : i32
      %c0_i32_23 = arith.constant 0 : i32
      %37 = tpu.memref_slice %arg2[%36, %c0_i32_23] : memref<64x32xf32, #tpu.memory_space<any>> -> memref<1x32xf32, #tpu.memory_space<any>>
      %38 = tpu.memref_squeeze %37 : memref<1x32xf32, #tpu.memory_space<any>> -> memref<32xf32, #tpu.memory_space<any>>
      %c0_i32_24 = arith.constant 0 : i32
      %39 = tpu.memref_slice %arg3[%c7_i32_21, %c0_i32_24] : memref<16x32xf32, #tpu.memory_space<vmem>> -> memref<1x32xf32, #tpu.memory_space<vmem>>
      %40 = tpu.memref_squeeze %39 : memref<1x32xf32, #tpu.memory_space<vmem>> -> memref<32xf32, #tpu.memory_space<vmem>>
      %41 = tpu.memref_slice %arg4[%c7_i32_22] : memref<8x!tpu.dma_semaphore, #tpu.memory_space<semaphore_mem>> -> memref<1x!tpu.dma_semaphore, #tpu.memory_space<semaphore_mem>>
      %42 = tpu.memref_squeeze %41 : memref<1x!tpu.dma_semaphore, #tpu.memory_space<semaphore_mem>> -> memref<!tpu.dma_semaphore, #tpu.memory_space<semaphore_mem>>
      tpu.enqueue_dma source(%38 : memref<32xf32, #tpu.memory_space<any>>) target(%40 : memref<32xf32, #tpu.memory_space<vmem>>) target_semaphore(%42 : memref<!tpu.dma_semaphore, #tpu.memory_space<semaphore_mem>>)
    } else {
    }
    %c0_i32_16 = arith.constant 0 : i32
    %c16_i32_17 = arith.constant 16 : i32
    %33 = arith.addi %c0_i32_16, %c16_i32_17 : i32
    %c1_i32_18 = arith.constant 1 : i32
    scf.for %arg5 = %c0_i32_16 to %33 step %c1_i32_18  : i32 {
      %c1_i32_20 = arith.constant 1 : i32
      %34 = arith.muli %arg5, %c1_i32_20 : i32
      %c0_i32_21 = arith.constant 0 : i32
      %35 = arith.addi %c0_i32_21, %34 : i32
      %36 = arith.addi %0, %35 : i32
      %c16_i32_22 = arith.constant 16 : i32
      %37 = arith.cmpi slt, %36, %c16_i32_22 : i32
      %38 = arith.extui %37 : i1 to i32
      %c0_i32_23 = arith.constant 0 : i32
      %39 = arith.cmpi ne, %38, %c0_i32_23 : i32
      scf.if %39 {
        %c8_i32_28 = arith.constant 8 : i32
        %c0_i32_29 = arith.constant 0 : i32
        %48 = arith.cmpi eq, %c8_i32_28, %c0_i32_29 : i32
        %c1_i32_30 = arith.constant 1 : i32
        %49 = arith.select %48, %c1_i32_30, %c8_i32_28 : i32
        %50 = arith.remsi %35, %49 : i32
        %c0_i32_31 = arith.constant 0 : i32
        %51 = arith.cmpi ne, %50, %c0_i32_31 : i32
        %c0_i32_32 = arith.constant 0 : i32
        %52 = arith.cmpi slt, %50, %c0_i32_32 : i32
        %c0_i32_33 = arith.constant 0 : i32
        %53 = arith.cmpi slt, %49, %c0_i32_33 : i32
        %54 = arith.xori %52, %53 : i1
        %55 = arith.andi %54, %51 : i1
        %56 = arith.addi %50, %49 : i32
        %57 = arith.select %55, %56, %50 : i32
        %c0_i32_34 = arith.constant 0 : i32
        %c0_i32_35 = arith.constant 0 : i32
        %58 = tpu.memref_slice %arg2[%c0_i32_34, %c0_i32_35] : memref<64x32xf32, #tpu.memory_space<any>> -> memref<1x32xf32, #tpu.memory_space<any>>
        %59 = tpu.memref_squeeze %58 : memref<1x32xf32, #tpu.memory_space<any>> -> memref<32xf32, #tpu.memory_space<any>>
        %c0_i32_36 = arith.constant 0 : i32
        %60 = tpu.memref_slice %arg3[%35, %c0_i32_36] : memref<16x32xf32, #tpu.memory_space<vmem>> -> memref<1x32xf32, #tpu.memory_space<vmem>>
        %61 = tpu.memref_squeeze %60 : memref<1x32xf32, #tpu.memory_space<vmem>> -> memref<32xf32, #tpu.memory_space<vmem>>
        %62 = tpu.memref_slice %arg4[%57] : memref<8x!tpu.dma_semaphore, #tpu.memory_space<semaphore_mem>> -> memref<1x!tpu.dma_semaphore, #tpu.memory_space<semaphore_mem>>
        %63 = tpu.memref_squeeze %62 : memref<1x!tpu.dma_semaphore, #tpu.memory_space<semaphore_mem>> -> memref<!tpu.dma_semaphore, #tpu.memory_space<semaphore_mem>>
        tpu.wait_dma2 semaphore(%63 : memref<!tpu.dma_semaphore, #tpu.memory_space<semaphore_mem>>) src(%59 : memref<32xf32, #tpu.memory_space<any>>) dst(%61 : memref<32xf32, #tpu.memory_space<vmem>>)
      } else {
      }
      %c8_i32 = arith.constant 8 : i32
      %40 = arith.addi %35, %c8_i32 : i32
      %c16_i32_24 = arith.constant 16 : i32
      %41 = arith.cmpi slt, %40, %c16_i32_24 : i32
      %42 = arith.addi %0, %35 : i32
      %c8_i32_25 = arith.constant 8 : i32
      %43 = arith.addi %42, %c8_i32_25 : i32
      %c16_i32_26 = arith.constant 16 : i32
      %44 = arith.cmpi slt, %43, %c16_i32_26 : i32
      %45 = arith.andi %41, %44 : i1
      %46 = arith.extui %45 : i1 to i32
      %c0_i32_27 = arith.constant 0 : i32
      %47 = arith.cmpi ne, %46, %c0_i32_27 : i32
      scf.if %47 {
        %c8_i32_28 = arith.constant 8 : i32
        %48 = arith.addi %35, %c8_i32_28 : i32
        %49 = arith.addi %0, %48 : i32
        %50 = arith.index_cast %49 : i32 to index
        %51 = memref.load %arg1[%50] : memref<16xi32, #tpu.memory_space<smem>>
        %c8_i32_29 = arith.constant 8 : i32
        %c0_i32_30 = arith.constant 0 : i32
        %52 = arith.cmpi eq, %c8_i32_29, %c0_i32_30 : i32
        %c1_i32_31 = arith.constant 1 : i32
        %53 = arith.select %52, %c1_i32_31, %c8_i32_29 : i32
        %54 = arith.remsi %48, %53 : i32
        %c0_i32_32 = arith.constant 0 : i32
        %55 = arith.cmpi ne, %54, %c0_i32_32 : i32
        %c0_i32_33 = arith.constant 0 : i32
        %56 = arith.cmpi slt, %54, %c0_i32_33 : i32
        %c0_i32_34 = arith.constant 0 : i32
        %57 = arith.cmpi slt, %53, %c0_i32_34 : i32
        %58 = arith.xori %56, %57 : i1
        %59 = arith.andi %58, %55 : i1
        %60 = arith.addi %54, %53 : i32
        %61 = arith.select %59, %60, %54 : i32
        %c0_i32_35 = arith.constant 0 : i32
        %62 = tpu.memref_slice %arg2[%51, %c0_i32_35] : memref<64x32xf32, #tpu.memory_space<any>> -> memref<1x32xf32, #tpu.memory_space<any>>
        %63 = tpu.memref_squeeze %62 : memref<1x32xf32, #tpu.memory_space<any>> -> memref<32xf32, #tpu.memory_space<any>>
        %c0_i32_36 = arith.constant 0 : i32
        %64 = tpu.memref_slice %arg3[%48, %c0_i32_36] : memref<16x32xf32, #tpu.memory_space<vmem>> -> memref<1x32xf32, #tpu.memory_space<vmem>>
        %65 = tpu.memref_squeeze %64 : memref<1x32xf32, #tpu.memory_space<vmem>> -> memref<32xf32, #tpu.memory_space<vmem>>
        %66 = tpu.memref_slice %arg4[%61] : memref<8x!tpu.dma_semaphore, #tpu.memory_space<semaphore_mem>> -> memref<1x!tpu.dma_semaphore, #tpu.memory_space<semaphore_mem>>
        %67 = tpu.memref_squeeze %66 : memref<1x!tpu.dma_semaphore, #tpu.memory_space<semaphore_mem>> -> memref<!tpu.dma_semaphore, #tpu.memory_space<semaphore_mem>>
        tpu.enqueue_dma source(%63 : memref<32xf32, #tpu.memory_space<any>>) target(%65 : memref<32xf32, #tpu.memory_space<vmem>>) target_semaphore(%67 : memref<!tpu.dma_semaphore, #tpu.memory_space<semaphore_mem>>)
      } else {
      }
    }
    %c16_i32_19 = arith.constant 16 : i32
    return
  }
  func.func @transform_1(%arg0: i32, %arg1: memref<16xi32, #tpu.memory_space<smem>>) -> (i32, i32) {
    %c0_i32 = arith.constant 0 : i32
    %c0_i32_0 = arith.constant 0 : i32
    return %arg0, %c0_i32 : i32, i32
  }
}

</mosaic_0001>

<llo_original>
// kernel: tpu_custom_call.1
$region0: #{tpu_custom_call.1}
  #allocation0 [shape = 'u32[]', space=smem, size = 0x4, offset = 0x4, fixed_abs, tag = 'smem constant byte address 0x4 - core index']
  #allocation1 [shape = 'u32[72,128]{1,0:T(1,128)}', space=vmem, size = 0x9000, scoped, tag = 'internal scratch']
  #allocation2 [shape = 's32[8]{0}', space=sflag, size = 0x20, scoped, tag = 'scratch operand']
  #allocation3 [shape = 's32[1]{0}', space=sflag, size = 0x4, scoped, tag = 'scoped memory for tpu_custom_call.1']
  #allocation4 [shape = 'u8[512]{0}', space=smem, size = 0x200, scoped, tag = 'prefetched SMEM operand 0']
  #allocation7 [shape = 's32[]', space=sflag, size = 0x4, offset = 0, fixed_abs, tag = 'sflag constant byte address 0x0 - dummy sync flag']
  #allocation8 [shape = 's32[]', space=sflag, size = 0x4, offset = 0, fixed_abs, tag = 'sflag constant byte address 0x0 - dummy sync flag']
  #allocation9 [shape = 's32[]', space=sflag, size = 0x4, offset = 0, fixed_abs, tag = 'sflag constant byte address 0x0 - dummy sync flag']
  #allocation10 [shape = 's32[]', space=sflag, size = 0x4, offset = 0, fixed_abs, tag = 'sflag constant byte address 0x0 - dummy sync flag']
  #allocation11 [shape = 's32[]', space=sflag, size = 0x4, offset = 0, fixed_abs, tag = 'sflag constant byte address 0x0 - dummy sync flag']
  #allocation12 [shape = 's32[]', space=sflag, size = 0x4, offset = 0, fixed_abs, tag = 'sflag constant byte address 0x0 - dummy sync flag']
  #allocation13 [shape = 's32[]', space=sflag, size = 0x4, offset = 0, fixed_abs, tag = 'sflag constant byte address 0x0 - dummy sync flag']
  #allocation14 [shape = 's32[]', space=sflag, size = 0x4, offset = 0, fixed_abs, tag = 'sflag constant byte address 0x0 - dummy sync flag']
  #allocation15 [shape = 's32[]', space=sflag, size = 0x4, offset = 0, fixed_abs, tag = 'sflag constant byte address 0x0 - dummy sync flag']
  %s0 = inlined_call_operand.vmem [shape: s32[16], index: 0, kind: input, shape index: {}]
  %s1 = inlined_call_operand.vmem [shape: f32[64,32], index: 1, kind: input, shape index: {}]
  %s2 = inlined_call_operand.hbm [shape: f32[16,32], index: 2, kind: output, shape index: {}]
  %s3 = sld [smem:[#allocation0]]
  $region327: #{tpu_custom_call.1} parent=0
    _
  %s5 = ssub.s32 1, %s3
  %s6 = scalar_select 0, %s5, %s3
  %s8 = sshll.u32 %s0, 4
  %s9 = int_to_ptr.vmem [resolvable:$true] %s8
  %11 = dma.vmem_to_smem %s9, 16, [#allocation4], [#allocation3]
  %13 = dma.done [#allocation3], 16
  %14 = sfence
  $region1: #{tpu_custom_call.1} parent=0
    #allocation5 [shape = 'u8[8192]{0}', space=vmem, size = 0x2000, scoped, tag = 'output window, operand 0, single buffered']
    #allocation6 [shape = 's32[1]{0}', space=sflag, size = 0x4, scoped, tag = 'scoped memory for tpu_custom_call.1']
    %15 = vsyncpa [#allocation6], 0
    %s16 = smul.u32 0, 16
    %p17 = scmp.lt.s32.totalorder %s16, 16
    // Predicated region
    $region2: #{tpu_custom_call.1} parent=1 // pred_check
      %p18 = pneg %p17
    $region3: #{tpu_custom_call.1} parent=1 // pred_check_branch
      %20 = sbr.rel (%p18) target = $region5
    $region4: #{tpu_custom_call.1} parent=1 // pred_region
      %s21 = sld [smem:[#allocation4 + %s16]]
      %s22 = scalar_lea.vmem %s1, %s21
      // Predicated region
      $region6: #{tpu_custom_call.1} parent=4 // pred_check
        _
      $region7: #{tpu_custom_call.1} parent=4 // pred_check_branch
        %24 = sbr.rel target = $region9
      $region8: #{tpu_custom_call.1} parent=4 // pred_region
        // Predicated region
        $region21: #{tpu_custom_call.1} parent=8 // pred_check
          _
        $region22: #{tpu_custom_call.1} parent=8 // pred_check_branch
          %40 = sbr.rel (0) target = $region24
        $region23: #{tpu_custom_call.1} parent=8 // pred_region
          %s42 = ssub.s32 2, 1
          loop: start=0, step=1, limit=1
          $region25: #{tpu_custom_call.1} parent=23 // loop_pre_header
            _
          $region26: #{tpu_custom_call.1} parent=23 // loop_header
            %s44 = sphi 0, %s48
            %p45 = scmp.ge.s32.totalorder %s44, 1
            %s49 = sphi %s22, %s22
            %s50 = sphi [#allocation5], [#allocation5]
          $region27: #{tpu_custom_call.1} parent=23 // loop_header_branch
            %47 = sbr.rel (%p45) target = $region31
          $region28: #{tpu_custom_call.1} parent=23 // loop_body
            %v51 = vld [vmem:[%s49] sm:%s42]
            %52 = vst [vmem:[%s50] sm:%s42] %v51
          $region29: #{tpu_custom_call.1} parent=23 // loop_footer
            %s48 = sadd.s32 1, %s44
          $region30: #{tpu_custom_call.1} parent=23 // loop_footer_branch
            %43 = sbr.rel target = $region26
          $region31: #{tpu_custom_call.1} parent=23 // loop_exit
            _
        $region24: #{tpu_custom_call.1} parent=8 // pred_fallthru
          _
      $region9: #{tpu_custom_call.1} parent=4 // pred_fallthru
        _
      // Predicated region
      $region10: #{tpu_custom_call.1} parent=4 // pred_check
        _
      $region11: #{tpu_custom_call.1} parent=4 // pred_check_branch
        %26 = sbr.rel (0) target = $region13
      $region12: #{tpu_custom_call.1} parent=4 // pred_region
        %s28 = ssub.s32 2, 1
        loop: start=0, step=1, limit=1
        $region14: #{tpu_custom_call.1} parent=12 // loop_pre_header
          _
        $region15: #{tpu_custom_call.1} parent=12 // loop_header
          %s30 = sphi 0, %s34
          %p31 = scmp.ge.s32.totalorder %s30, 1
          %s35 = sphi %s22, %s22
          %s36 = sphi [#allocation5], [#allocation5]
        $region16: #{tpu_custom_call.1} parent=12 // loop_header_branch
          %33 = sbr.rel (%p31) target = $region20
        $region17: #{tpu_custom_call.1} parent=12 // loop_body
          %v37 = vld [vmem:[%s35] sm:%s28]
          %38 = vst [vmem:[%s36] sm:%s28] %v37
        $region18: #{tpu_custom_call.1} parent=12 // loop_footer
          %s34 = sadd.s32 1, %s30
        $region19: #{tpu_custom_call.1} parent=12 // loop_footer_branch
          %29 = sbr.rel target = $region15
        $region20: #{tpu_custom_call.1} parent=12 // loop_exit
          _
      $region13: #{tpu_custom_call.1} parent=4 // pred_fallthru
        _
      // Predicated region
      $region32: #{tpu_custom_call.1} parent=4 // pred_check
        _
      $region33: #{tpu_custom_call.1} parent=4 // pred_check_branch
        %55 = sbr.rel (0) target = $region35
      $region34: #{tpu_custom_call.1} parent=4 // pred_region
        %56 = vsyncadd [#allocation2], 16
      $region35: #{tpu_custom_call.1} parent=4 // pred_fallthru
        _
    $region5: #{tpu_custom_call.1} parent=1 // pred_fallthru
      _
    %s57 = sadd.s32 %s16, 1
    %p58 = scmp.lt.s32.totalorder %s57, 16
    // Predicated region
    $region36: #{tpu_custom_call.1} parent=1 // pred_check
      %p59 = pneg %p58
    $region37: #{tpu_custom_call.1} parent=1 // pred_check_branch
      %61 = sbr.rel (%p59) target = $region39
    $region38: #{tpu_custom_call.1} parent=1 // pred_region
      %s62 = sld [smem:[#allocation4 + %s57]]
      %s63 = scalar_lea.vmem %s1, %s62
      %s64 = scalar_lea.vmem [#allocation5], 1
      %s65 = scalar_lea.sflag [#allocation2], 1
      // Predicated region
      $region40: #{tpu_custom_call.1} parent=38 // pred_check
        _
      $region41: #{tpu_custom_call.1} parent=38 // pred_check_branch
        %67 = sbr.rel target = $region43
      $region42: #{tpu_custom_call.1} parent=38 // pred_region
        // Predicated region
        $region55: #{tpu_custom_call.1} parent=42 // pred_check
          _
        $region56: #{tpu_custom_call.1} parent=42 // pred_check_branch
          %83 = sbr.rel (0) target = $region58
        $region57: #{tpu_custom_call.1} parent=42 // pred_region
          %s85 = ssub.s32 2, 1
          loop: start=0, step=1, limit=1
          $region59: #{tpu_custom_call.1} parent=57 // loop_pre_header
            _
          $region60: #{tpu_custom_call.1} parent=57 // loop_header
            %s87 = sphi 0, %s91
            %p88 = scmp.ge.s32.totalorder %s87, 1
            %s92 = sphi %s63, %s63
            %s93 = sphi %s64, %s64
          $region61: #{tpu_custom_call.1} parent=57 // loop_header_branch
            %90 = sbr.rel (%p88) target = $region65
          $region62: #{tpu_custom_call.1} parent=57 // loop_body
            %v94 = vld [vmem:[%s92] sm:%s85]
            %95 = vst [vmem:[%s93] sm:%s85] %v94
          $region63: #{tpu_custom_call.1} parent=57 // loop_footer
            %s91 = sadd.s32 1, %s87
          $region64: #{tpu_custom_call.1} parent=57 // loop_footer_branch
            %86 = sbr.rel target = $region60
          $region65: #{tpu_custom_call.1} parent=57 // loop_exit
            _
        $region58: #{tpu_custom_call.1} parent=42 // pred_fallthru
          _
      $region43: #{tpu_custom_call.1} parent=38 // pred_fallthru
        _
      // Predicated region
      $region44: #{tpu_custom_call.1} parent=38 // pred_check
        _
      $region45: #{tpu_custom_call.1} parent=38 // pred_check_branch
        %69 = sbr.rel (0) target = $region47
      $region46: #{tpu_custom_call.1} parent=38 // pred_region
        %s71 = ssub.s32 2, 1
        loop: start=0, step=1, limit=1
        $region48: #{tpu_custom_call.1} parent=46 // loop_pre_header
          _
        $region49: #{tpu_custom_call.1} parent=46 // loop_header
          %s73 = sphi 0, %s77
          %p74 = scmp.ge.s32.totalorder %s73, 1
          %s78 = sphi %s63, %s63
          %s79 = sphi %s64, %s64
        $region50: #{tpu_custom_call.1} parent=46 // loop_header_branch
          %76 = sbr.rel (%p74) target = $region54
        $region51: #{tpu_custom_call.1} parent=46 // loop_body
          %v80 = vld [vmem:[%s78] sm:%s71]
          %81 = vst [vmem:[%s79] sm:%s71] %v80
        $region52: #{tpu_custom_call.1} parent=46 // loop_footer
          %s77 = sadd.s32 1, %s73
        $region53: #{tpu_custom_call.1} parent=46 // loop_footer_branch
          %72 = sbr.rel target = $region49
        $region54: #{tpu_custom_call.1} parent=46 // loop_exit
          _
      $region47: #{tpu_custom_call.1} parent=38 // pred_fallthru
        _
      // Predicated region
      $region66: #{tpu_custom_call.1} parent=38 // pred_check
        _
      $region67: #{tpu_custom_call.1} parent=38 // pred_check_branch
        %98 = sbr.rel (0) target = $region69
      $region68: #{tpu_custom_call.1} parent=38 // pred_region
        %99 = vsyncadd %s65, 16
      $region69: #{tpu_custom_call.1} parent=38 // pred_fallthru
        _
    $region39: #{tpu_custom_call.1} parent=1 // pred_fallthru
      _
    %s100 = sadd.s32 %s16, 2
    %p101 = scmp.lt.s32.totalorder %s100, 16
    // Predicated region
    $region70: #{tpu_custom_call.1} parent=1 // pred_check
      %p102 = pneg %p101
    $region71: #{tpu_custom_call.1} parent=1 // pred_check_branch
      %104 = sbr.rel (%p102) target = $region73
    $region72: #{tpu_custom_call.1} parent=1 // pred_region
      %s105 = sld [smem:[#allocation4 + %s100]]
      %s106 = scalar_lea.vmem %s1, %s105
      %s107 = scalar_lea.vmem [#allocation5], 2
      %s108 = scalar_lea.sflag [#allocation2], 2
      // Predicated region
      $region74: #{tpu_custom_call.1} parent=72 // pred_check
        _
      $region75: #{tpu_custom_call.1} parent=72 // pred_check_branch
        %110 = sbr.rel target = $region77
      $region76: #{tpu_custom_call.1} parent=72 // pred_region
        // Predicated region
        $region89: #{tpu_custom_call.1} parent=76 // pred_check
          _
        $region90: #{tpu_custom_call.1} parent=76 // pred_check_branch
          %126 = sbr.rel (0) target = $region92
        $region91: #{tpu_custom_call.1} parent=76 // pred_region
          %s128 = ssub.s32 2, 1
          loop: start=0, step=1, limit=1
          $region93: #{tpu_custom_call.1} parent=91 // loop_pre_header
            _
          $region94: #{tpu_custom_call.1} parent=91 // loop_header
            %s130 = sphi 0, %s134
            %p131 = scmp.ge.s32.totalorder %s130, 1
            %s135 = sphi %s106, %s106
            %s136 = sphi %s107, %s107
          $region95: #{tpu_custom_call.1} parent=91 // loop_header_branch
            %133 = sbr.rel (%p131) target = $region99
          $region96: #{tpu_custom_call.1} parent=91 // loop_body
            %v137 = vld [vmem:[%s135] sm:%s128]
            %138 = vst [vmem:[%s136] sm:%s128] %v137
          $region97: #{tpu_custom_call.1} parent=91 // loop_footer
            %s134 = sadd.s32 1, %s130
          $region98: #{tpu_custom_call.1} parent=91 // loop_footer_branch
            %129 = sbr.rel target = $region94
          $region99: #{tpu_custom_call.1} parent=91 // loop_exit
            _
        $region92: #{tpu_custom_call.1} parent=76 // pred_fallthru
          _
      $region77: #{tpu_custom_call.1} parent=72 // pred_fallthru
        _
      // Predicated region
      $region78: #{tpu_custom_call.1} parent=72 // pred_check
        _
      $region79: #{tpu_custom_call.1} parent=72 // pred_check_branch
        %112 = sbr.rel (0) target = $region81
      $region80: #{tpu_custom_call.1} parent=72 // pred_region
        %s114 = ssub.s32 2, 1
        loop: start=0, step=1, limit=1
        $region82: #{tpu_custom_call.1} parent=80 // loop_pre_header
          _
        $region83: #{tpu_custom_call.1} parent=80 // loop_header
          %s116 = sphi 0, %s120
          %p117 = scmp.ge.s32.totalorder %s116, 1
          %s121 = sphi %s106, %s106
          %s122 = sphi %s107, %s107
        $region84: #{tpu_custom_call.1} parent=80 // loop_header_branch
          %119 = sbr.rel (%p117) target = $region88
        $region85: #{tpu_custom_call.1} parent=80 // loop_body
          %v123 = vld [vmem:[%s121] sm:%s114]
          %124 = vst [vmem:[%s122] sm:%s114] %v123
        $region86: #{tpu_custom_call.1} parent=80 // loop_footer
          %s120 = sadd.s32 1, %s116
        $region87: #{tpu_custom_call.1} parent=80 // loop_footer_branch
          %115 = sbr.rel target = $region83
        $region88: #{tpu_custom_call.1} parent=80 // loop_exit
          _
      $region81: #{tpu_custom_call.1} parent=72 // pred_fallthru
        _
      // Predicated region
      $region100: #{tpu_custom_call.1} parent=72 // pred_check
        _
      $region101: #{tpu_custom_call.1} parent=72 // pred_check_branch
        %141 = sbr.rel (0) target = $region103
      $region102: #{tpu_custom_call.1} parent=72 // pred_region
        %142 = vsyncadd %s108, 16
      $region103: #{tpu_custom_call.1} parent=72 // pred_fallthru
        _
    $region73: #{tpu_custom_call.1} parent=1 // pred_fallthru
      _
    %s143 = sadd.s32 %s16, 3
    %p144 = scmp.lt.s32.totalorder %s143, 16
    // Predicated region
    $region104: #{tpu_custom_call.1} parent=1 // pred_check
      %p145 = pneg %p144
    $region105: #{tpu_custom_call.1} parent=1 // pred_check_branch
      %147 = sbr.rel (%p145) target = $region107
    $region106: #{tpu_custom_call.1} parent=1 // pred_region
      %s148 = sld [smem:[#allocation4 + %s143]]
      %s149 = scalar_lea.vmem %s1, %s148
      %s150 = scalar_lea.vmem [#allocation5], 3
      %s151 = scalar_lea.sflag [#allocation2], 3
      // Predicated region
      $region108: #{tpu_custom_call.1} parent=106 // pred_check
        _
      $region109: #{tpu_custom_call.1} parent=106 // pred_check_branch
        %153 = sbr.rel target = $region111
      $region110: #{tpu_custom_call.1} parent=106 // pred_region
        // Predicated region
        $region123: #{tpu_custom_call.1} parent=110 // pred_check
          _
        $region124: #{tpu_custom_call.1} parent=110 // pred_check_branch
          %169 = sbr.rel (0) target = $region126
        $region125: #{tpu_custom_call.1} parent=110 // pred_region
          %s171 = ssub.s32 2, 1
          loop: start=0, step=1, limit=1
          $region127: #{tpu_custom_call.1} parent=125 // loop_pre_header
            _
          $region128: #{tpu_custom_call.1} parent=125 // loop_header
            %s173 = sphi 0, %s177
            %p174 = scmp.ge.s32.totalorder %s173, 1
            %s178 = sphi %s149, %s149
            %s179 = sphi %s150, %s150
          $region129: #{tpu_custom_call.1} parent=125 // loop_header_branch
            %176 = sbr.rel (%p174) target = $region133
          $region130: #{tpu_custom_call.1} parent=125 // loop_body
            %v180 = vld [vmem:[%s178] sm:%s171]
            %181 = vst [vmem:[%s179] sm:%s171] %v180
          $region131: #{tpu_custom_call.1} parent=125 // loop_footer
            %s177 = sadd.s32 1, %s173
          $region132: #{tpu_custom_call.1} parent=125 // loop_footer_branch
            %172 = sbr.rel target = $region128
          $region133: #{tpu_custom_call.1} parent=125 // loop_exit
            _
        $region126: #{tpu_custom_call.1} parent=110 // pred_fallthru
          _
      $region111: #{tpu_custom_call.1} parent=106 // pred_fallthru
        _
      // Predicated region
      $region112: #{tpu_custom_call.1} parent=106 // pred_check
        _
      $region113: #{tpu_custom_call.1} parent=106 // pred_check_branch
        %155 = sbr.rel (0) target = $region115
      $region114: #{tpu_custom_call.1} parent=106 // pred_region
        %s157 = ssub.s32 2, 1
        loop: start=0, step=1, limit=1
        $region116: #{tpu_custom_call.1} parent=114 // loop_pre_header
          _
        $region117: #{tpu_custom_call.1} parent=114 // loop_header
          %s159 = sphi 0, %s163
          %p160 = scmp.ge.s32.totalorder %s159, 1
          %s164 = sphi %s149, %s149
          %s165 = sphi %s150, %s150
        $region118: #{tpu_custom_call.1} parent=114 // loop_header_branch
          %162 = sbr.rel (%p160) target = $region122
        $region119: #{tpu_custom_call.1} parent=114 // loop_body
          %v166 = vld [vmem:[%s164] sm:%s157]
          %167 = vst [vmem:[%s165] sm:%s157] %v166
        $region120: #{tpu_custom_call.1} parent=114 // loop_footer
          %s163 = sadd.s32 1, %s159
        $region121: #{tpu_custom_call.1} parent=114 // loop_footer_branch
          %158 = sbr.rel target = $region117
        $region122: #{tpu_custom_call.1} parent=114 // loop_exit
          _
      $region115: #{tpu_custom_call.1} parent=106 // pred_fallthru
        _
      // Predicated region
      $region134: #{tpu_custom_call.1} parent=106 // pred_check
        _
      $region135: #{tpu_custom_call.1} parent=106 // pred_check_branch
        %184 = sbr.rel (0) target = $region137
      $region136: #{tpu_custom_call.1} parent=106 // pred_region
        %185 = vsyncadd %s151, 16
      $region137: #{tpu_custom_call.1} parent=106 // pred_fallthru
        _
    $region107: #{tpu_custom_call.1} parent=1 // pred_fallthru
      _
    %s186 = sadd.s32 %s16, 4
    %p187 = scmp.lt.s32.totalorder %s186, 16
    // Predicated region
    $region138: #{tpu_custom_call.1} parent=1 // pred_check
      %p188 = pneg %p187
    $region139: #{tpu_custom_call.1} parent=1 // pred_check_branch
      %190 = sbr.rel (%p188) target = $region141
    $region140: #{tpu_custom_call.1} parent=1 // pred_region
      %s191 = sld [smem:[#allocation4 + %s186]]
      %s192 = scalar_lea.vmem %s1, %s191
      %s193 = scalar_lea.vmem [#allocation5], 4
      %s194 = scalar_lea.sflag [#allocation2], 4
      // Predicated region
      $region142: #{tpu_custom_call.1} parent=140 // pred_check
        _
      $region143: #{tpu_custom_call.1} parent=140 // pred_check_branch
        %196 = sbr.rel target = $region145
      $region144: #{tpu_custom_call.1} parent=140 // pred_region
        // Predicated region
        $region157: #{tpu_custom_call.1} parent=144 // pred_check
          _
        $region158: #{tpu_custom_call.1} parent=144 // pred_check_branch
          %212 = sbr.rel (0) target = $region160
        $region159: #{tpu_custom_call.1} parent=144 // pred_region
          %s214 = ssub.s32 2, 1
          loop: start=0, step=1, limit=1
          $region161: #{tpu_custom_call.1} parent=159 // loop_pre_header
            _
          $region162: #{tpu_custom_call.1} parent=159 // loop_header
            %s216 = sphi 0, %s220
            %p217 = scmp.ge.s32.totalorder %s216, 1
            %s221 = sphi %s192, %s192
            %s222 = sphi %s193, %s193
          $region163: #{tpu_custom_call.1} parent=159 // loop_header_branch
            %219 = sbr.rel (%p217) target = $region167
          $region164: #{tpu_custom_call.1} parent=159 // loop_body
            %v223 = vld [vmem:[%s221] sm:%s214]
            %224 = vst [vmem:[%s222] sm:%s214] %v223
          $region165: #{tpu_custom_call.1} parent=159 // loop_footer
            %s220 = sadd.s32 1, %s216
          $region166: #{tpu_custom_call.1} parent=159 // loop_footer_branch
            %215 = sbr.rel target = $region162
          $region167: #{tpu_custom_call.1} parent=159 // loop_exit
            _
        $region160: #{tpu_custom_call.1} parent=144 // pred_fallthru
          _
      $region145: #{tpu_custom_call.1} parent=140 // pred_fallthru
        _
      // Predicated region
      $region146: #{tpu_custom_call.1} parent=140 // pred_check
        _
      $region147: #{tpu_custom_call.1} parent=140 // pred_check_branch
        %198 = sbr.rel (0) target = $region149
      $region148: #{tpu_custom_call.1} parent=140 // pred_region
        %s200 = ssub.s32 2, 1
        loop: start=0, step=1, limit=1
        $region150: #{tpu_custom_call.1} parent=148 // loop_pre_header
          _
        $region151: #{tpu_custom_call.1} parent=148 // loop_header
          %s202 = sphi 0, %s206
          %p203 = scmp.ge.s32.totalorder %s202, 1
          %s207 = sphi %s192, %s192
          %s208 = sphi %s193, %s193
        $region152: #{tpu_custom_call.1} parent=148 // loop_header_branch
          %205 = sbr.rel (%p203) target = $region156
        $region153: #{tpu_custom_call.1} parent=148 // loop_body
          %v209 = vld [vmem:[%s207] sm:%s200]
          %210 = vst [vmem:[%s208] sm:%s200] %v209
        $region154: #{tpu_custom_call.1} parent=148 // loop_footer
          %s206 = sadd.s32 1, %s202
        $region155: #{tpu_custom_call.1} parent=148 // loop_footer_branch
          %201 = sbr.rel target = $region151
        $region156: #{tpu_custom_call.1} parent=148 // loop_exit
          _
      $region149: #{tpu_custom_call.1} parent=140 // pred_fallthru
        _
      // Predicated region
      $region168: #{tpu_custom_call.1} parent=140 // pred_check
        _
      $region169: #{tpu_custom_call.1} parent=140 // pred_check_branch
        %227 = sbr.rel (0) target = $region171
      $region170: #{tpu_custom_call.1} parent=140 // pred_region
        %228 = vsyncadd %s194, 16
      $region171: #{tpu_custom_call.1} parent=140 // pred_fallthru
        _
    $region141: #{tpu_custom_call.1} parent=1 // pred_fallthru
      _
    %s229 = sadd.s32 %s16, 5
    %p230 = scmp.lt.s32.totalorder %s229, 16
    // Predicated region
    $region172: #{tpu_custom_call.1} parent=1 // pred_check
      %p231 = pneg %p230
    $region173: #{tpu_custom_call.1} parent=1 // pred_check_branch
      %233 = sbr.rel (%p231) target = $region175
    $region174: #{tpu_custom_call.1} parent=1 // pred_region
      %s234 = sld [smem:[#allocation4 + %s229]]
      %s235 = scalar_lea.vmem %s1, %s234
      %s236 = scalar_lea.vmem [#allocation5], 5
      %s237 = scalar_lea.sflag [#allocation2], 5
      // Predicated region
      $region176: #{tpu_custom_call.1} parent=174 // pred_check
        _
      $region177: #{tpu_custom_call.1} parent=174 // pred_check_branch
        %239 = sbr.rel target = $region179
      $region178: #{tpu_custom_call.1} parent=174 // pred_region
        // Predicated region
        $region191: #{tpu_custom_call.1} parent=178 // pred_check
          _
        $region192: #{tpu_custom_call.1} parent=178 // pred_check_branch
          %255 = sbr.rel (0) target = $region194
        $region193: #{tpu_custom_call.1} parent=178 // pred_region
          %s257 = ssub.s32 2, 1
          loop: start=0, step=1, limit=1
          $region195: #{tpu_custom_call.1} parent=193 // loop_pre_header
            _
          $region196: #{tpu_custom_call.1} parent=193 // loop_header
            %s259 = sphi 0, %s263
            %p260 = scmp.ge.s32.totalorder %s259, 1
            %s264 = sphi %s235, %s235
            %s265 = sphi %s236, %s236
          $region197: #{tpu_custom_call.1} parent=193 // loop_header_branch
            %262 = sbr.rel (%p260) target = $region201
          $region198: #{tpu_custom_call.1} parent=193 // loop_body
            %v266 = vld [vmem:[%s264] sm:%s257]
            %267 = vst [vmem:[%s265] sm:%s257] %v266
          $region199: #{tpu_custom_call.1} parent=193 // loop_footer
            %s263 = sadd.s32 1, %s259
          $region200: #{tpu_custom_call.1} parent=193 // loop_footer_branch
            %258 = sbr.rel target = $region196
          $region201: #{tpu_custom_call.1} parent=193 // loop_exit
            _
        $region194: #{tpu_custom_call.1} parent=178 // pred_fallthru
          _
      $region179: #{tpu_custom_call.1} parent=174 // pred_fallthru
        _
      // Predicated region
      $region180: #{tpu_custom_call.1} parent=174 // pred_check
        _
      $region181: #{tpu_custom_call.1} parent=174 // pred_check_branch
        %241 = sbr.rel (0) target = $region183
      $region182: #{tpu_custom_call.1} parent=174 // pred_region
        %s243 = ssub.s32 2, 1
        loop: start=0, step=1, limit=1
        $region184: #{tpu_custom_call.1} parent=182 // loop_pre_header
          _
        $region185: #{tpu_custom_call.1} parent=182 // loop_header
          %s245 = sphi 0, %s249
          %p246 = scmp.ge.s32.totalorder %s245, 1
          %s250 = sphi %s235, %s235
          %s251 = sphi %s236, %s236
        $region186: #{tpu_custom_call.1} parent=182 // loop_header_branch
          %248 = sbr.rel (%p246) target = $region190
        $region187: #{tpu_custom_call.1} parent=182 // loop_body
          %v252 = vld [vmem:[%s250] sm:%s243]
          %253 = vst [vmem:[%s251] sm:%s243] %v252
        $region188: #{tpu_custom_call.1} parent=182 // loop_footer
          %s249 = sadd.s32 1, %s245
        $region189: #{tpu_custom_call.1} parent=182 // loop_footer_branch
          %244 = sbr.rel target = $region185
        $region190: #{tpu_custom_call.1} parent=182 // loop_exit
          _
      $region183: #{tpu_custom_call.1} parent=174 // pred_fallthru
        _
      // Predicated region
      $region202: #{tpu_custom_call.1} parent=174 // pred_check
        _
      $region203: #{tpu_custom_call.1} parent=174 // pred_check_branch
        %270 = sbr.rel (0) target = $region205
      $region204: #{tpu_custom_call.1} parent=174 // pred_region
        %271 = vsyncadd %s237, 16
      $region205: #{tpu_custom_call.1} parent=174 // pred_fallthru
        _
    $region175: #{tpu_custom_call.1} parent=1 // pred_fallthru
      _
    %s272 = sadd.s32 %s16, 6
    %p273 = scmp.lt.s32.totalorder %s272, 16
    // Predicated region
    $region206: #{tpu_custom_call.1} parent=1 // pred_check
      %p274 = pneg %p273
    $region207: #{tpu_custom_call.1} parent=1 // pred_check_branch
      %276 = sbr.rel (%p274) target = $region209
    $region208: #{tpu_custom_call.1} parent=1 // pred_region
      %s277 = sld [smem:[#allocation4 + %s272]]
      %s278 = scalar_lea.vmem %s1, %s277
      %s279 = scalar_lea.vmem [#allocation5], 6
      %s280 = scalar_lea.sflag [#allocation2], 6
      // Predicated region
      $region210: #{tpu_custom_call.1} parent=208 // pred_check
        _
      $region211: #{tpu_custom_call.1} parent=208 // pred_check_branch
        %282 = sbr.rel target = $region213
      $region212: #{tpu_custom_call.1} parent=208 // pred_region
        // Predicated region
        $region225: #{tpu_custom_call.1} parent=212 // pred_check
          _
        $region226: #{tpu_custom_call.1} parent=212 // pred_check_branch
          %298 = sbr.rel (0) target = $region228
        $region227: #{tpu_custom_call.1} parent=212 // pred_region
          %s300 = ssub.s32 2, 1
          loop: start=0, step=1, limit=1
          $region229: #{tpu_custom_call.1} parent=227 // loop_pre_header
            _
          $region230: #{tpu_custom_call.1} parent=227 // loop_header
            %s302 = sphi 0, %s306
            %p303 = scmp.ge.s32.totalorder %s302, 1
            %s307 = sphi %s278, %s278
            %s308 = sphi %s279, %s279
          $region231: #{tpu_custom_call.1} parent=227 // loop_header_branch
            %305 = sbr.rel (%p303) target = $region235
          $region232: #{tpu_custom_call.1} parent=227 // loop_body
            %v309 = vld [vmem:[%s307] sm:%s300]
            %310 = vst [vmem:[%s308] sm:%s300] %v309
          $region233: #{tpu_custom_call.1} parent=227 // loop_footer
            %s306 = sadd.s32 1, %s302
          $region234: #{tpu_custom_call.1} parent=227 // loop_footer_branch
            %301 = sbr.rel target = $region230
          $region235: #{tpu_custom_call.1} parent=227 // loop_exit
            _
        $region228: #{tpu_custom_call.1} parent=212 // pred_fallthru
          _
      $region213: #{tpu_custom_call.1} parent=208 // pred_fallthru
        _
      // Predicated region
      $region214: #{tpu_custom_call.1} parent=208 // pred_check
        _
      $region215: #{tpu_custom_call.1} parent=208 // pred_check_branch
        %284 = sbr.rel (0) target = $region217
      $region216: #{tpu_custom_call.1} parent=208 // pred_region
        %s286 = ssub.s32 2, 1
        loop: start=0, step=1, limit=1
        $region218: #{tpu_custom_call.1} parent=216 // loop_pre_header
          _
        $region219: #{tpu_custom_call.1} parent=216 // loop_header
          %s288 = sphi 0, %s292
          %p289 = scmp.ge.s32.totalorder %s288, 1
          %s293 = sphi %s278, %s278
          %s294 = sphi %s279, %s279
        $region220: #{tpu_custom_call.1} parent=216 // loop_header_branch
          %291 = sbr.rel (%p289) target = $region224
        $region221: #{tpu_custom_call.1} parent=216 // loop_body
          %v295 = vld [vmem:[%s293] sm:%s286]
          %296 = vst [vmem:[%s294] sm:%s286] %v295
        $region222: #{tpu_custom_call.1} parent=216 // loop_footer
          %s292 = sadd.s32 1, %s288
        $region223: #{tpu_custom_call.1} parent=216 // loop_footer_branch
          %287 = sbr.rel target = $region219
        $region224: #{tpu_custom_call.1} parent=216 // loop_exit
          _
      $region217: #{tpu_custom_call.1} parent=208 // pred_fallthru
        _
      // Predicated region
      $region236: #{tpu_custom_call.1} parent=208 // pred_check
        _
      $region237: #{tpu_custom_call.1} parent=208 // pred_check_branch
        %313 = sbr.rel (0) target = $region239
      $region238: #{tpu_custom_call.1} parent=208 // pred_region
        %314 = vsyncadd %s280, 16
      $region239: #{tpu_custom_call.1} parent=208 // pred_fallthru
        _
    $region209: #{tpu_custom_call.1} parent=1 // pred_fallthru
      _
    %s315 = sadd.s32 %s16, 7
    %p316 = scmp.lt.s32.totalorder %s315, 16
    // Predicated region
    $region240: #{tpu_custom_call.1} parent=1 // pred_check
      %p317 = pneg %p316
    $region241: #{tpu_custom_call.1} parent=1 // pred_check_branch
      %319 = sbr.rel (%p317) target = $region243
    $region242: #{tpu_custom_call.1} parent=1 // pred_region
      %s320 = sld [smem:[#allocation4 + %s315]]
      %s321 = scalar_lea.vmem %s1, %s320
      %s322 = scalar_lea.vmem [#allocation5], 7
      %s323 = scalar_lea.sflag [#allocation2], 7
      // Predicated region
      $region244: #{tpu_custom_call.1} parent=242 // pred_check
        _
      $region245: #{tpu_custom_call.1} parent=242 // pred_check_branch
        %325 = sbr.rel target = $region247
      $region246: #{tpu_custom_call.1} parent=242 // pred_region
        // Predicated region
        $region259: #{tpu_custom_call.1} parent=246 // pred_check
          _
        $region260: #{tpu_custom_call.1} parent=246 // pred_check_branch
          %341 = sbr.rel (0) target = $region262
        $region261: #{tpu_custom_call.1} parent=246 // pred_region
          %s343 = ssub.s32 2, 1
          loop: start=0, step=1, limit=1
          $region263: #{tpu_custom_call.1} parent=261 // loop_pre_header
            _
          $region264: #{tpu_custom_call.1} parent=261 // loop_header
            %s345 = sphi 0, %s349
            %p346 = scmp.ge.s32.totalorder %s345, 1
            %s350 = sphi %s321, %s321
            %s351 = sphi %s322, %s322
          $region265: #{tpu_custom_call.1} parent=261 // loop_header_branch
            %348 = sbr.rel (%p346) target = $region269
          $region266: #{tpu_custom_call.1} parent=261 // loop_body
            %v352 = vld [vmem:[%s350] sm:%s343]
            %353 = vst [vmem:[%s351] sm:%s343] %v352
          $region267: #{tpu_custom_call.1} parent=261 // loop_footer
            %s349 = sadd.s32 1, %s345
          $region268: #{tpu_custom_call.1} parent=261 // loop_footer_branch
            %344 = sbr.rel target = $region264
          $region269: #{tpu_custom_call.1} parent=261 // loop_exit
            _
        $region262: #{tpu_custom_call.1} parent=246 // pred_fallthru
          _
      $region247: #{tpu_custom_call.1} parent=242 // pred_fallthru
        _
      // Predicated region
      $region248: #{tpu_custom_call.1} parent=242 // pred_check
        _
      $region249: #{tpu_custom_call.1} parent=242 // pred_check_branch
        %327 = sbr.rel (0) target = $region251
      $region250: #{tpu_custom_call.1} parent=242 // pred_region
        %s329 = ssub.s32 2, 1
        loop: start=0, step=1, limit=1
        $region252: #{tpu_custom_call.1} parent=250 // loop_pre_header
          _
        $region253: #{tpu_custom_call.1} parent=250 // loop_header
          %s331 = sphi 0, %s335
          %p332 = scmp.ge.s32.totalorder %s331, 1
          %s336 = sphi %s321, %s321
          %s337 = sphi %s322, %s322
        $region254: #{tpu_custom_call.1} parent=250 // loop_header_branch
          %334 = sbr.rel (%p332) target = $region258
        $region255: #{tpu_custom_call.1} parent=250 // loop_body
          %v338 = vld [vmem:[%s336] sm:%s329]
          %339 = vst [vmem:[%s337] sm:%s329] %v338
        $region256: #{tpu_custom_call.1} parent=250 // loop_footer
          %s335 = sadd.s32 1, %s331
        $region257: #{tpu_custom_call.1} parent=250 // loop_footer_branch
          %330 = sbr.rel target = $region253
        $region258: #{tpu_custom_call.1} parent=250 // loop_exit
          _
      $region251: #{tpu_custom_call.1} parent=242 // pred_fallthru
        _
      // Predicated region
      $region270: #{tpu_custom_call.1} parent=242 // pred_check
        _
      $region271: #{tpu_custom_call.1} parent=242 // pred_check_branch
        %356 = sbr.rel (0) target = $region273
      $region272: #{tpu_custom_call.1} parent=242 // pred_region
        %357 = vsyncadd %s323, 16
      $region273: #{tpu_custom_call.1} parent=242 // pred_fallthru
        _
    $region243: #{tpu_custom_call.1} parent=1 // pred_fallthru
      _
    loop: start=0, step=1, limit=16
    $region274: #{tpu_custom_call.1} parent=1 // loop_pre_header
      _
    $region275: #{tpu_custom_call.1} parent=1 // loop_header
      %s359 = sphi 0, %s363
      %p360 = scmp.ge.s32.totalorder %s359, 16
    $region276: #{tpu_custom_call.1} parent=1 // loop_header_branch
      %362 = sbr.rel (%p360) target = $region280
    $region277: #{tpu_custom_call.1} parent=1 // loop_body
      %s364 = sadd.s32 %s16, %s359
      %p365 = scmp.lt.s32.totalorder %s364, 16
      // Predicated region
      $region281: #{tpu_custom_call.1} parent=277 // pred_check
        %p366 = pneg %p365
      $region282: #{tpu_custom_call.1} parent=277 // pred_check_branch
        %368 = sbr.rel (%p366) target = $region284
      $region283: #{tpu_custom_call.1} parent=277 // pred_region
        %p369 = scmp.lt.s32.totalorder %s359, 0
        %s370 = ssub.s32 0, %s359
        %s371 = scalar_select %p369, %s370, %s359
        %s372 = sand.u32 %s371, 7
        %s373 = ssub.s32 0, %s372
        %s374 = scalar_select %p369, %s373, %s372
        %p375 = scmp.ne.s32.totalorder %s374, 0
        %p376 = scmp.lt.s32.totalorder %s374, 0
        %p377 = pnand %p376, %p375
        %p378 = pneg %p377
        %s379 = sadd.s32 %s374, 8
        %s380 = scalar_select %p378, %s379, %s374
        %s381 = scalar_lea.sflag [#allocation2], %s380
        %383 = dma.done %s381, 16
      $region284: #{tpu_custom_call.1} parent=277 // pred_fallthru
        _
      %s384 = sadd.s32 %s359, 8
      %p385 = scmp.lt.s32.totalorder %s384, 16
      %s386 = sadd.s32 %s364, 8
      %p387 = scmp.lt.s32.totalorder %s386, 16
      %p388 = pnand %p385, %p387
      %p389 = pneg %p388
      // Predicated region
      $region285: #{tpu_custom_call.1} parent=277 // pred_check
        _
      $region286: #{tpu_custom_call.1} parent=277 // pred_check_branch
        %391 = sbr.rel (%p388) target = $region288
      $region287: #{tpu_custom_call.1} parent=277 // pred_region
        %s392 = sadd.s32 %s16, %s384
        %s393 = sld [smem:[#allocation4 + %s392]]
        %p394 = scmp.lt.s32.totalorder %s384, 0
        %s395 = ssub.s32 0, %s384
        %s396 = scalar_select %p394, %s395, %s384
        %s397 = sand.u32 %s396, 7
        %s398 = ssub.s32 0, %s397
        %s399 = scalar_select %p394, %s398, %s397
        %p400 = scmp.ne.s32.totalorder %s399, 0
        %p401 = scmp.lt.s32.totalorder %s399, 0
        %p402 = pnand %p401, %p400
        %p403 = pneg %p402
        %s404 = sadd.s32 %s399, 8
        %s405 = scalar_select %p403, %s404, %s399
        %s406 = scalar_lea.vmem %s1, %s393
        %s407 = scalar_lea.vmem [#allocation5], %s384
        %s408 = scalar_lea.sflag [#allocation2], %s405
        // Predicated region
        $region289: #{tpu_custom_call.1} parent=287 // pred_check
          _
        $region290: #{tpu_custom_call.1} parent=287 // pred_check_branch
          %410 = sbr.rel target = $region292
        $region291: #{tpu_custom_call.1} parent=287 // pred_region
          // Predicated region
          $region304: #{tpu_custom_call.1} parent=291 // pred_check
            _
          $region305: #{tpu_custom_call.1} parent=291 // pred_check_branch
            %426 = sbr.rel (0) target = $region307
          $region306: #{tpu_custom_call.1} parent=291 // pred_region
            %s428 = ssub.s32 2, 1
            loop: start=0, step=1, limit=1
            $region308: #{tpu_custom_call.1} parent=306 // loop_pre_header
              _
            $region309: #{tpu_custom_call.1} parent=306 // loop_header
              %s430 = sphi 0, %s434
              %p431 = scmp.ge.s32.totalorder %s430, 1
              %s435 = sphi %s406, %s406
              %s436 = sphi %s407, %s407
            $region310: #{tpu_custom_call.1} parent=306 // loop_header_branch
              %433 = sbr.rel (%p431) target = $region314
            $region311: #{tpu_custom_call.1} parent=306 // loop_body
              %v437 = vld [vmem:[%s435] sm:%s428]
              %438 = vst [vmem:[%s436] sm:%s428] %v437
            $region312: #{tpu_custom_call.1} parent=306 // loop_footer
              %s434 = sadd.s32 1, %s430
            $region313: #{tpu_custom_call.1} parent=306 // loop_footer_branch
              %429 = sbr.rel target = $region309
            $region314: #{tpu_custom_call.1} parent=306 // loop_exit
              _
          $region307: #{tpu_custom_call.1} parent=291 // pred_fallthru
            _
        $region292: #{tpu_custom_call.1} parent=287 // pred_fallthru
          _
        // Predicated region
        $region293: #{tpu_custom_call.1} parent=287 // pred_check
          _
        $region294: #{tpu_custom_call.1} parent=287 // pred_check_branch
          %412 = sbr.rel (0) target = $region296
        $region295: #{tpu_custom_call.1} parent=287 // pred_region
          %s414 = ssub.s32 2, 1
          loop: start=0, step=1, limit=1
          $region297: #{tpu_custom_call.1} parent=295 // loop_pre_header
            _
          $region298: #{tpu_custom_call.1} parent=295 // loop_header
            %s416 = sphi 0, %s420
            %p417 = scmp.ge.s32.totalorder %s416, 1
            %s421 = sphi %s406, %s406
            %s422 = sphi %s407, %s407
          $region299: #{tpu_custom_call.1} parent=295 // loop_header_branch
            %419 = sbr.rel (%p417) target = $region303
          $region300: #{tpu_custom_call.1} parent=295 // loop_body
            %v423 = vld [vmem:[%s421] sm:%s414]
            %424 = vst [vmem:[%s422] sm:%s414] %v423
          $region301: #{tpu_custom_call.1} parent=295 // loop_footer
            %s420 = sadd.s32 1, %s416
          $region302: #{tpu_custom_call.1} parent=295 // loop_footer_branch
            %415 = sbr.rel target = $region298
          $region303: #{tpu_custom_call.1} parent=295 // loop_exit
            _
        $region296: #{tpu_custom_call.1} parent=287 // pred_fallthru
          _
        // Predicated region
        $region315: #{tpu_custom_call.1} parent=287 // pred_check
          _
        $region316: #{tpu_custom_call.1} parent=287 // pred_check_branch
          %441 = sbr.rel (0) target = $region318
        $region317: #{tpu_custom_call.1} parent=287 // pred_region
          %442 = vsyncadd %s408, 16
        $region318: #{tpu_custom_call.1} parent=287 // pred_fallthru
          _
      $region288: #{tpu_custom_call.1} parent=277 // pred_fallthru
        _
    $region278: #{tpu_custom_call.1} parent=1 // loop_footer
      %s363 = sadd.s32 1, %s359
    $region279: #{tpu_custom_call.1} parent=1 // loop_footer_branch
      %358 = sbr.rel target = $region275
    $region280: #{tpu_custom_call.1} parent=1 // loop_exit
      _
    // Predicated region
    $region319: #{tpu_custom_call.1} parent=1 // pred_check
      _
    $region320: #{tpu_custom_call.1} parent=1 // pred_check_branch
      %444 = sbr.rel (0) target = $region322
    $region321: #{tpu_custom_call.1} parent=1 // pred_region
      %446 = vsyncadd [#allocation6], 0
      %s447 = sshll.u32 [#allocation5], 4
      %s448 = int_to_ptr.vmem [resolvable:$true] %s447
      %s449 = sshll.u32 %s2, 4
      %s450 = int_to_ptr.hbm [resolvable:$true] %s449
      %455 = dma.vmem_to_hbm [thread:$0]  %s448, 256, %s450, [#allocation6], 128, 128, 8
    $region322: #{tpu_custom_call.1} parent=1 // pred_fallthru
      _
    // Predicated region
    $region323: #{tpu_custom_call.1} parent=1 // pred_check
      _
    $region324: #{tpu_custom_call.1} parent=1 // pred_check_branch
      %457 = sbr.rel (0) target = $region326
    $region325: #{tpu_custom_call.1} parent=1 // pred_region
      %459 = dma.done [#allocation6], 256
    $region326: #{tpu_custom_call.1} parent=1 // pred_fallthru
      _
    %460 = vsyncpa [#allocation6], 1
  %461 = vsyncmov [#allocation2]
  %s462 = vpop.sfrf %461
  %p463 = scmp.eq.s32.totalorder %s462, 0
  %p464 = pneg %p463
  %466 = shalt.err (%p464)
  %s467 = scalar_lea.sflag [#allocation2], 1
  %468 = vsyncmov %s467
  %s469 = vpop.sfrf %468
  %p470 = scmp.eq.s32.totalorder %s469, 0
  %p471 = pneg %p470
  %473 = shalt.err (%p471)
  %s474 = scalar_lea.sflag [#allocation2], 2
  %475 = vsyncmov %s474
  %s476 = vpop.sfrf %475
  %p477 = scmp.eq.s32.totalorder %s476, 0
  %p478 = pneg %p477
  %480 = shalt.err (%p478)
  %s481 = scalar_lea.sflag [#allocation2], 3
  %482 = vsyncmov %s481
  %s483 = vpop.sfrf %482
  %p484 = scmp.eq.s32.totalorder %s483, 0
  %p485 = pneg %p484
  %487 = shalt.err (%p485)
  %s488 = scalar_lea.sflag [#allocation2], 4
  %489 = vsyncmov %s488
  %s490 = vpop.sfrf %489
  %p491 = scmp.eq.s32.totalorder %s490, 0
  %p492 = pneg %p491
  %494 = shalt.err (%p492)
  %s495 = scalar_lea.sflag [#allocation2], 5
  %496 = vsyncmov %s495
  %s497 = vpop.sfrf %496
  %p498 = scmp.eq.s32.totalorder %s497, 0
  %p499 = pneg %p498
  %501 = shalt.err (%p499)
  %s502 = scalar_lea.sflag [#allocation2], 6
  %503 = vsyncmov %s502
  %s504 = vpop.sfrf %503
  %p505 = scmp.eq.s32.totalorder %s504, 0
  %p506 = pneg %p505
  %508 = shalt.err (%p506)
  %s509 = scalar_lea.sflag [#allocation2], 7
  %510 = vsyncmov %s509
  %s511 = vpop.sfrf %510
  %p512 = scmp.eq.s32.totalorder %s511, 0
  %p513 = pneg %p512
  %515 = shalt.err (%p513)

</llo_original>
